<compile_context>
chip_gen: v5e
topology: v5e:2x2
jax: 0.10.0
libtpu: 0.0.40
codegen_flags: <defaults>
</compile_context>

<pallas_src>
import math

import jax
import jax.numpy as jnp
from jax.experimental import pallas as pl
from jax.experimental.pallas import tpu as pltpu


def _flow_speed_kernel(speed_ref, kj_ref, inv_v_ref, out_ref):
    """speed_ref/out_ref: (TR, TC); kj_ref/inv_v_ref: (1, TC) f32 per-column params."""
    s = speed_ref[...].astype(jnp.float32)          # rows -> sublanes, cols -> lanes
    kj = kj_ref[...]                                # (1, TC), broadcasts over sublanes
    inv_v = inv_v_ref[...]                          # (1, TC) = 1 / (Vf + 1e-5)
    out_ref[...] = (kj * (s - (s * s) * inv_v)).astype(out_ref.dtype)


def _sublane_align(dtype):
    """Minimum sublane multiple for the dtype: 8 (f32), 16 (bf16), 32 (int8/fp8)."""
    return max(8, 32 // jnp.dtype(dtype).itemsize)


def _pick_block(dim, target, align):
    """Full dim if it fits, else the largest aligned block <= target."""
    if dim <= target:
        return int(dim)
    t = (target // align) * align
    return int(max(t, align))


def flow_speed(speed, kj, vf, *, block_rows=512, block_cols=2048):
    """speed: (..., N, T); kj, vf: (N, 1) f32 -> same shape/dtype as speed."""
    orig_shape = speed.shape
    N, T = int(orig_shape[-2]), int(orig_shape[-1])
    lead = orig_shape[:-2]
    R = int(math.prod(lead)) if lead else 1
    C = N * T

    # Contiguous 2-D view: rows = leading dims, cols = node x trailing (lane-dense).
    speed2 = speed.reshape(R, C)

    # Per-node params expanded to per-column rows; divide hoisted to per-node.
    kj_f32 = jnp.asarray(kj, jnp.float32).reshape(N)
    vf_f32 = jnp.asarray(vf, jnp.float32).reshape(N)
    inv_v = 1.0 / (vf_f32 + 1e-5)
    kj_row = jnp.repeat(kj_f32, T).reshape(1, C)
    inv_row = jnp.repeat(inv_v, T).reshape(1, C)

    itemsize = jnp.dtype(speed.dtype).itemsize
    TR = _pick_block(R, block_rows, _sublane_align(speed.dtype))
    TC = _pick_block(C, block_cols, 128)

    # Column-blocks outer (params stay resident over the inner row loop).
    grid = (pl.cdiv(C, TC), pl.cdiv(R, TR))

    # VMEM budget: in + out blocks (double buffered) + param rows + headroom.
    block_bytes = TR * TC * itemsize
    param_bytes = 2 * TC * 4
    need = 2 * (2 * block_bytes + param_bytes)
    vmem_limit = int(min(48 << 20, max(32 << 20, need + (2 << 20))))

    total = int(speed.size)
    cost = pl.CostEstimate(
        flops=4 * total,
        transcendentals=0,
        bytes_accessed=2 * total * itemsize + 2 * C * 4,
    )

    out2 = pl.pallas_call(
        _flow_speed_kernel,
        out_shape=jax.ShapeDtypeStruct((R, C), speed.dtype),
        grid_spec=pltpu.PrefetchScalarGridSpec(
            num_scalar_prefetch=0,
            grid=grid,
            in_specs=[
                pl.BlockSpec((TR, TC), lambda ci, ri: (ri, ci)),
                pl.BlockSpec((1, TC), lambda ci, ri: (0, ci)),
                pl.BlockSpec((1, TC), lambda ci, ri: (0, ci)),
            ],
            out_specs=pl.BlockSpec((TR, TC), lambda ci, ri: (ri, ci)),
        ),
        compiler_params=pltpu.CompilerParams(
            dimension_semantics=("parallel", "parallel"),
            vmem_limit_bytes=vmem_limit,
        ),
        cost_estimate=cost,
    )(speed2, kj_row, inv_row)

    return out2.reshape(orig_shape)


def init_params(key, num_of_nodes):
    """Deterministic xavier_normal_ init for (N, 1) parameters.

    For a 2D tensor of shape (N, 1): fan_in = 1, fan_out = N,
    std = sqrt(2 / (fan_in + fan_out)).
    """
    k1, k2 = jax.random.split(key)
    std = math.sqrt(2.0 / (num_of_nodes + 1))
    kj = std * jax.random.normal(k1, (num_of_nodes, 1), dtype=jnp.float32)
    vf = std * jax.random.normal(k2, (num_of_nodes, 1), dtype=jnp.float32)
    return kj, vf


if __name__ == "__main__":
    key = jax.random.PRNGKey(0)
    k_params, k_speed = jax.random.split(key)

    # Shapes consistent with how the Encoder applies FlowSpeed: Qs has shape
    # (batch, heads, time, num_of_vertices, head_dim); Kj/Vf are (N, 1).
    B, H, T, N, Dk = 2, 4, 8, 20, 16
    kj, vf = init_params(k_params, N)
    speed = jax.random.uniform(k_speed, (B, H, T, N, Dk), dtype=jnp.float32)

    # Reference in plain JAX (mirrors the PyTorch forward exactly).
    ref = kj * (speed - jnp.square(speed) / (vf + 1e-5))
    scale = jnp.max(jnp.abs(ref)) + 1e-6

    # 1) Default (large-block) config: single lane-dense tile here.
    flow = jax.block_until_ready(flow_speed(speed, kj, vf))
    assert flow.shape == speed.shape
    rel_err = float(jnp.max(jnp.abs(flow - ref)) / scale)
    assert rel_err < 1e-5, f"f32 rel_err={rel_err}"

    # 2) Small blocks -> multi-step cdiv grid with ragged edges (R=64 vs 24,
    #    C=320 vs 128) to exercise the padded/masked boundary path.
    flow_small = jax.block_until_ready(
        flow_speed(speed, kj, vf, block_rows=24, block_cols=128)
    )
    rel_err_small = float(jnp.max(jnp.abs(flow_small - ref)) / scale)
    assert rel_err_small < 1e-5, f"ragged-grid rel_err={rel_err_small}"

    # 3) bf16 I/O path (halves HBM traffic; arithmetic stays f32 in-kernel).
    speed_bf16 = speed.astype(jnp.bfloat16)
    flow_bf16 = jax.block_until_ready(flow_speed(speed_bf16, kj, vf))
    assert flow_bf16.dtype == jnp.bfloat16
    s16 = speed_bf16.astype(jnp.float32)
    ref16 = (kj * (s16 - jnp.square(s16) / (vf + 1e-5))).astype(jnp.bfloat16)
    scale16 = jnp.max(jnp.abs(ref16.astype(jnp.float32))) + 1e-6
    rel_err16 = float(
        jnp.max(jnp.abs(flow_bf16.astype(jnp.float32) - ref16.astype(jnp.float32)))
        / scale16
    )
    assert rel_err16 < 2e-2, f"bf16 rel_err={rel_err16}"

    print("KERNEL_OK")
</pallas_src>

<mosaic_0001>
module attributes {stable_mosaic.version = 11 : i64} {
  func.func @_flow_speed_kernel(%arg0: i32, %arg1: i32, %arg2: memref<64x320xf32, #tpu.memory_space<vmem>>, %arg3: memref<1x320xf32, #tpu.memory_space<vmem>>, %arg4: memref<1x320xf32, #tpu.memory_space<vmem>>, %arg5: memref<64x320xf32, #tpu.memory_space<vmem>>) attributes {dimension_semantics = [#tpu.dimension_semantics<parallel>, #tpu.dimension_semantics<parallel>], iteration_bounds = array<i64: 1, 1>, scalar_prefetch = 0 : i64, scratch_operands = 0 : i64, tpu.core_type = #tpu.core_type<tc>, window_params = [{transform_indices = @transform_0, window_bounds = array<i64: 64, 320>}, {transform_indices = @transform_1, window_bounds = array<i64: 1, 320>}, {transform_indices = @transform_2, window_bounds = array<i64: 1, 320>}, {transform_indices = @transform_3, window_bounds = array<i64: 64, 320>}]} {
    %c0 = arith.constant 0 : index
    %c0_0 = arith.constant 0 : index
    %0 = vector.load %arg2[%c0, %c0_0] : memref<64x320xf32, #tpu.memory_space<vmem>>, vector<64x320xf32>
    %c0_1 = arith.constant 0 : index
    %c0_2 = arith.constant 0 : index
    %1 = vector.load %arg3[%c0_1, %c0_2] : memref<1x320xf32, #tpu.memory_space<vmem>>, vector<1x320xf32>
    %c0_3 = arith.constant 0 : index
    %c0_4 = arith.constant 0 : index
    %2 = vector.load %arg4[%c0_3, %c0_4] : memref<1x320xf32, #tpu.memory_space<vmem>>, vector<1x320xf32>
    %3 = arith.mulf %0, %0 : vector<64x320xf32>
    %4 = vector.broadcast %2 : vector<1x320xf32> to vector<64x320xf32>
    %5 = arith.mulf %3, %4 : vector<64x320xf32>
    %6 = arith.subf %0, %5 : vector<64x320xf32>
    %7 = vector.broadcast %1 : vector<1x320xf32> to vector<64x320xf32>
    %8 = arith.mulf %7, %6 : vector<64x320xf32>
    %c0_5 = arith.constant 0 : index
    %c0_6 = arith.constant 0 : index
    %9 = vector.load %arg5[%c0_5, %c0_6] : memref<64x320xf32, #tpu.memory_space<vmem>>, vector<64x320xf32>
    tpu.vector_store %arg5[%c0_5, %c0_6], %8 {strides = array<i32>} : memref<64x320xf32, #tpu.memory_space<vmem>>, vector<64x320xf32>,
    return
  }
  func.func @transform_0(%arg0: i32, %arg1: i32) -> (i32, i32) {
    %c0_i32 = arith.constant 0 : i32
    return %arg1, %arg0 : i32, i32
  }
  func.func @transform_1(%arg0: i32, %arg1: i32) -> (i32, i32) {
    %c0_i32 = arith.constant 0 : i32
    %c0_i32_0 = arith.constant 0 : i32
    return %c0_i32, %arg0 : i32, i32
  }
  func.func @transform_2(%arg0: i32, %arg1: i32) -> (i32, i32) {
    %c0_i32 = arith.constant 0 : i32
    %c0_i32_0 = arith.constant 0 : i32
    return %c0_i32, %arg0 : i32, i32
  }
  func.func @transform_3(%arg0: i32, %arg1: i32) -> (i32, i32) {
    %c0_i32 = arith.constant 0 : i32
    return %arg1, %arg0 : i32, i32
  }
}

</mosaic_0001>

<llo_original>
// kernel: tpu_custom_call.1
$region0: #{tpu_custom_call.1}
  #allocation0 [shape = 'u32[]', space=smem, size = 0x4, offset = 0x4, fixed_abs, tag = 'smem constant byte address 0x4 - core index']
  #allocation1 [shape = 'u32[72,128]{1,0:T(1,128)}', space=vmem, size = 0x9000, scoped, tag = 'internal scratch']
  %s0 = inlined_call_operand.hbm [shape: f32[64,320], index: 0, kind: input, shape index: {}]
  %s1 = inlined_call_operand.hbm [shape: f32[1,320], index: 1, kind: input, shape index: {}]
  %s2 = inlined_call_operand.hbm [shape: f32[1,320], index: 2, kind: input, shape index: {}]
  %s3 = inlined_call_operand.hbm [shape: f32[64,320], index: 3, kind: output, shape index: {}]
  %s4 = sld [smem:[#allocation0]]
  $region34: #{tpu_custom_call.1} parent=0
    _
  %s6 = ssub.s32 1, %s4
  %s7 = scalar_select 0, %s6, %s4
  $region1: #{tpu_custom_call.1} parent=0
    #allocation2 [shape = 'u8[98304]{0}', space=vmem, size = 0x18000, scoped, tag = 'input window, operand 0, single buffered']
    #allocation3 [shape = 's32[1]{0}', space=sflag, size = 0x4, scoped, tag = 'scoped memory for tpu_custom_call.1']
    #allocation4 [shape = 's32[1]{0}', space=sflag, size = 0x4, scoped, tag = 'scoped memory for tpu_custom_call.1']
    #allocation5 [shape = 'u8[1536]{0}', space=vmem, size = 0x800, scoped, tag = 'input window, operand 1, single buffered']
    #allocation6 [shape = 's32[1]{0}', space=sflag, size = 0x4, scoped, tag = 'scoped memory for tpu_custom_call.1']
    #allocation7 [shape = 'u8[1536]{0}', space=vmem, size = 0x800, scoped, tag = 'input window, operand 2, single buffered']
    #allocation8 [shape = 'u8[98304]{0}', space=vmem, size = 0x18000, scoped, tag = 'output window, operand 0, single buffered']
    %8 = vsyncpa [#allocation3], 0
    %9 = vsyncpa [#allocation6], 0
    %10 = vsyncpa [#allocation4], 0
    // Predicated region
    $region2: #{tpu_custom_call.1} parent=1 // pred_check
      _
    $region3: #{tpu_custom_call.1} parent=1 // pred_check_branch
      %12 = sbr.rel (0) target = $region5
    $region4: #{tpu_custom_call.1} parent=1 // pred_region
      %14 = vsyncadd [#allocation3], 0
      %s15 = sshll.u32 %s0, 4
      %s16 = int_to_ptr.hbm [resolvable:$true] %s15
      %s17 = sshll.u32 [#allocation2], 4
      %s18 = int_to_ptr.vmem [resolvable:$true] %s17
      %23 = dma.hbm_to_vmem [thread:$0]  %s16, 3072, %s18, [#allocation3], 384, 384, 24
    $region5: #{tpu_custom_call.1} parent=1 // pred_fallthru
      _
    // Predicated region
    $region6: #{tpu_custom_call.1} parent=1 // pred_check
      _
    $region7: #{tpu_custom_call.1} parent=1 // pred_check_branch
      %25 = sbr.rel (0) target = $region9
    $region8: #{tpu_custom_call.1} parent=1 // pred_region
      %27 = vsyncadd [#allocation6], 0
      %s29 = sshll.u32 %s1, 4
      %s30 = int_to_ptr.hbm [resolvable:$true] %s29
      %s31 = sshll.u32 [#allocation5], 4
      %s32 = int_to_ptr.vmem [resolvable:$true] %s31
      %34 = dma.hbm_to_vmem [thread:$0]  %s30, 48, %s32, [#allocation6]
    $region9: #{tpu_custom_call.1} parent=1 // pred_fallthru
      _
    // Predicated region
    $region10: #{tpu_custom_call.1} parent=1 // pred_check
      _
    $region11: #{tpu_custom_call.1} parent=1 // pred_check_branch
      %36 = sbr.rel (0) target = $region13
    $region12: #{tpu_custom_call.1} parent=1 // pred_region
      %38 = vsyncadd [#allocation6], 0
      %s40 = sshll.u32 %s2, 4
      %s41 = int_to_ptr.hbm [resolvable:$true] %s40
      %s42 = sshll.u32 [#allocation7], 4
      %s43 = int_to_ptr.vmem [resolvable:$true] %s42
      %45 = dma.hbm_to_vmem [thread:$0]  %s41, 48, %s43, [#allocation6]
    $region13: #{tpu_custom_call.1} parent=1 // pred_fallthru
      _
    // Predicated region
    $region14: #{tpu_custom_call.1} parent=1 // pred_check
      _
    $region15: #{tpu_custom_call.1} parent=1 // pred_check_branch
      %47 = sbr.rel (0) target = $region17
    $region16: #{tpu_custom_call.1} parent=1 // pred_region
      %49 = dma.done [#allocation3], 3072
    $region17: #{tpu_custom_call.1} parent=1 // pred_fallthru
      _
    // Predicated region
    $region18: #{tpu_custom_call.1} parent=1 // pred_check
      _
    $region19: #{tpu_custom_call.1} parent=1 // pred_check_branch
      %51 = sbr.rel (0) target = $region21
    $region20: #{tpu_custom_call.1} parent=1 // pred_region
      %53 = dma.done [#allocation6], 48
    $region21: #{tpu_custom_call.1} parent=1 // pred_fallthru
      _
    // Predicated region
    $region22: #{tpu_custom_call.1} parent=1 // pred_check
      _
    $region23: #{tpu_custom_call.1} parent=1 // pred_check_branch
      %55 = sbr.rel (0) target = $region25
    $region24: #{tpu_custom_call.1} parent=1 // pred_region
      %57 = dma.done [#allocation6], 48
    $region25: #{tpu_custom_call.1} parent=1 // pred_fallthru
      _
    %v58 = vld [vmem:[#allocation2] sm:$0xff]
    %v59 = vld [vmem:[#allocation2 + $0x8] sm:$0xff]
    %v60 = vld [vmem:[#allocation2 + $0x10] sm:$0xff]
    %v61 = vld [vmem:[#allocation2 + $0x18] sm:$0xff]
    %v62 = vld [vmem:[#allocation2 + $0x20] sm:$0xff]
    %v63 = vld [vmem:[#allocation2 + $0x28] sm:$0xff]
    %v64 = vld [vmem:[#allocation2 + $0x30] sm:$0xff]
    %v65 = vld [vmem:[#allocation2 + $0x38] sm:$0xff]
    %v66 = vld [vmem:[#allocation2 + $0x40] sm:$0xff]
    %v67 = vld [vmem:[#allocation2 + $0x48] sm:$0xff]
    %v68 = vld [vmem:[#allocation2 + $0x50] sm:$0xff]
    %v69 = vld [vmem:[#allocation2 + $0x58] sm:$0xff]
    %v70 = vld [vmem:[#allocation2 + $0x60] sm:$0xff]
    %v71 = vld [vmem:[#allocation2 + $0x68] sm:$0xff]
    %v72 = vld [vmem:[#allocation2 + $0x70] sm:$0xff]
    %v73 = vld [vmem:[#allocation2 + $0x78] sm:$0xff]
    %v74 = vld [vmem:[#allocation2 + $0x80] sm:$0xff]
    %v75 = vld [vmem:[#allocation2 + $0x88] sm:$0xff]
    %v76 = vld [vmem:[#allocation2 + $0x90] sm:$0xff]
    %v77 = vld [vmem:[#allocation2 + $0x98] sm:$0xff]
    %v78 = vld [vmem:[#allocation2 + $0xa0] sm:$0xff]
    %v79 = vld [vmem:[#allocation2 + $0xa8] sm:$0xff]
    %v80 = vld [vmem:[#allocation2 + $0xb0] sm:$0xff]
    %v81 = vld [vmem:[#allocation2 + $0xb8] sm:$0xff]
    %v82 = vld [vmem:[#allocation5] sm:$0x7]
    %v83 = vld [vmem:[#allocation7] sm:$0x7]
    %v84 = vmul.f32 %v58, %v58
    %v85 = vmul.f32 %v59, %v59
    %v86 = vmul.f32 %v60, %v60
    %v87 = vmul.f32 %v61, %v61
    %v88 = vmul.f32 %v62, %v62
    %v89 = vmul.f32 %v63, %v63
    %v90 = vmul.f32 %v64, %v64
    %v91 = vmul.f32 %v65, %v65
    %v92 = vmul.f32 %v66, %v66
    %v93 = vmul.f32 %v67, %v67
    %v94 = vmul.f32 %v68, %v68
    %v95 = vmul.f32 %v69, %v69
    %v96 = vmul.f32 %v70, %v70
    %v97 = vmul.f32 %v71, %v71
    %v98 = vmul.f32 %v72, %v72
    %v99 = vmul.f32 %v73, %v73
    %v100 = vmul.f32 %v74, %v74
    %v101 = vmul.f32 %v75, %v75
    %v102 = vmul.f32 %v76, %v76
    %v103 = vmul.f32 %v77, %v77
    %v104 = vmul.f32 %v78, %v78
    %v105 = vmul.f32 %v79, %v79
    %v106 = vmul.f32 %v80, %v80
    %v107 = vmul.f32 %v81, %v81
    %v109 = vperm.slane %v83, 0
    %v110 = vperm.slane %v83, 1
    %v111 = vperm.slane %v83, 2
    %v115 = vmul.f32 %v84, %v109
    %v116 = vmul.f32 %v85, %v110
    %v117 = vmul.f32 %v86, %v111
    %v118 = vmul.f32 %v87, %v109
    %v119 = vmul.f32 %v88, %v110
    %v120 = vmul.f32 %v89, %v111
    %v121 = vmul.f32 %v90, %v109
    %v122 = vmul.f32 %v91, %v110
    %v123 = vmul.f32 %v92, %v111
    %v124 = vmul.f32 %v93, %v109
    %v125 = vmul.f32 %v94, %v110
    %v126 = vmul.f32 %v95, %v111
    %v127 = vmul.f32 %v96, %v109
    %v128 = vmul.f32 %v97, %v110
    %v129 = vmul.f32 %v98, %v111
    %v130 = vmul.f32 %v99, %v109
    %v131 = vmul.f32 %v100, %v110
    %v132 = vmul.f32 %v101, %v111
    %v133 = vmul.f32 %v102, %v109
    %v134 = vmul.f32 %v103, %v110
    %v135 = vmul.f32 %v104, %v111
    %v136 = vmul.f32 %v105, %v109
    %v137 = vmul.f32 %v106, %v110
    %v138 = vmul.f32 %v107, %v111
    %v139 = vsub.f32 %v58, %v115
    %v140 = vsub.f32 %v59, %v116
    %v141 = vsub.f32 %v60, %v117
    %v142 = vsub.f32 %v61, %v118
    %v143 = vsub.f32 %v62, %v119
    %v144 = vsub.f32 %v63, %v120
    %v145 = vsub.f32 %v64, %v121
    %v146 = vsub.f32 %v65, %v122
    %v147 = vsub.f32 %v66, %v123
    %v148 = vsub.f32 %v67, %v124
    %v149 = vsub.f32 %v68, %v125
    %v150 = vsub.f32 %v69, %v126
    %v151 = vsub.f32 %v70, %v127
    %v152 = vsub.f32 %v71, %v128
    %v153 = vsub.f32 %v72, %v129
    %v154 = vsub.f32 %v73, %v130
    %v155 = vsub.f32 %v74, %v131
    %v156 = vsub.f32 %v75, %v132
    %v157 = vsub.f32 %v76, %v133
    %v158 = vsub.f32 %v77, %v134
    %v159 = vsub.f32 %v78, %v135
    %v160 = vsub.f32 %v79, %v136
    %v161 = vsub.f32 %v80, %v137
    %v162 = vsub.f32 %v81, %v138
    %v164 = vperm.slane %v82, 0
    %v165 = vperm.slane %v82, 1
    %v166 = vperm.slane %v82, 2
    %v170 = vmul.f32 %v164, %v139
    %v171 = vmul.f32 %v165, %v140
    %v172 = vmul.f32 %v166, %v141
    %v173 = vmul.f32 %v164, %v142
    %v174 = vmul.f32 %v165, %v143
    %v175 = vmul.f32 %v166, %v144
    %v176 = vmul.f32 %v164, %v145
    %v177 = vmul.f32 %v165, %v146
    %v178 = vmul.f32 %v166, %v147
    %v179 = vmul.f32 %v164, %v148
    %v180 = vmul.f32 %v165, %v149
    %v181 = vmul.f32 %v166, %v150
    %v182 = vmul.f32 %v164, %v151
    %v183 = vmul.f32 %v165, %v152
    %v184 = vmul.f32 %v166, %v153
    %v185 = vmul.f32 %v164, %v154
    %v186 = vmul.f32 %v165, %v155
    %v187 = vmul.f32 %v166, %v156
    %v188 = vmul.f32 %v164, %v157
    %v189 = vmul.f32 %v165, %v158
    %v190 = vmul.f32 %v166, %v159
    %v191 = vmul.f32 %v164, %v160
    %v192 = vmul.f32 %v165, %v161
    %v193 = vmul.f32 %v166, %v162
    %194 = vst [vmem:[#allocation8] sm:$0xff] %v170
    %195 = vst [vmem:[#allocation8 + $0x8] sm:$0xff] %v171
    %vm196 = vcmask 523264
    %197 = vst.msk [vmem:[#allocation8 + $0x10] sm:$0xff] %vm196, %v172
    %198 = vst [vmem:[#allocation8 + $0x18] sm:$0xff] %v173
    %199 = vst [vmem:[#allocation8 + $0x20] sm:$0xff] %v174
    %200 = vst.msk [vmem:[#allocation8 + $0x28] sm:$0xff] %vm196, %v175
    %201 = vst [vmem:[#allocation8 + $0x30] sm:$0xff] %v176
    %202 = vst [vmem:[#allocation8 + $0x38] sm:$0xff] %v177
    %203 = vst.msk [vmem:[#allocation8 + $0x40] sm:$0xff] %vm196, %v178
    %204 = vst [vmem:[#allocation8 + $0x48] sm:$0xff] %v179
    %205 = vst [vmem:[#allocation8 + $0x50] sm:$0xff] %v180
    %206 = vst.msk [vmem:[#allocation8 + $0x58] sm:$0xff] %vm196, %v181
    %207 = vst [vmem:[#allocation8 + $0x60] sm:$0xff] %v182
    %208 = vst [vmem:[#allocation8 + $0x68] sm:$0xff] %v183
    %209 = vst.msk [vmem:[#allocation8 + $0x70] sm:$0xff] %vm196, %v184
    %210 = vst [vmem:[#allocation8 + $0x78] sm:$0xff] %v185
    %211 = vst [vmem:[#allocation8 + $0x80] sm:$0xff] %v186
    %212 = vst.msk [vmem:[#allocation8 + $0x88] sm:$0xff] %vm196, %v187
    %213 = vst [vmem:[#allocation8 + $0x90] sm:$0xff] %v188
    %214 = vst [vmem:[#allocation8 + $0x98] sm:$0xff] %v189
    %215 = vst.msk [vmem:[#allocation8 + $0xa0] sm:$0xff] %vm196, %v190
    %216 = vst [vmem:[#allocation8 + $0xa8] sm:$0xff] %v191
    %217 = vst [vmem:[#allocation8 + $0xb0] sm:$0xff] %v192
    %218 = vst.msk [vmem:[#allocation8 + $0xb8] sm:$0xff] %vm196, %v193
    // Predicated region
    $region26: #{tpu_custom_call.1} parent=1 // pred_check
      _
    $region27: #{tpu_custom_call.1} parent=1 // pred_check_branch
      %220 = sbr.rel (0) target = $region29
    $region28: #{tpu_custom_call.1} parent=1 // pred_region
      %222 = vsyncadd [#allocation4], 0
      %s223 = sshll.u32 [#allocation8], 4
      %s224 = int_to_ptr.vmem [resolvable:$true] %s223
      %s225 = sshll.u32 %s3, 4
      %s226 = int_to_ptr.hbm [resolvable:$true] %s225
      %231 = dma.vmem_to_hbm [thread:$0]  %s224, 3072, %s226, [#allocation4], 384, 384, 24
    $region29: #{tpu_custom_call.1} parent=1 // pred_fallthru
      _
    // Predicated region
    $region30: #{tpu_custom_call.1} parent=1 // pred_check
      _
    $region31: #{tpu_custom_call.1} parent=1 // pred_check_branch
      %233 = sbr.rel (0) target = $region33
    $region32: #{tpu_custom_call.1} parent=1 // pred_region
      %235 = dma.done [#allocation4], 3072
    $region33: #{tpu_custom_call.1} parent=1 // pred_fallthru
      _
    %236 = vsyncpa [#allocation3], 1
    %237 = vsyncpa [#allocation6], 1
    %238 = vsyncpa [#allocation4], 1

</llo_original>
